<compile_context>
chip_gen: v6e
topology: v6e:2x2x1
jax: 0.10.0
libtpu: 0.0.40
codegen_flags: <defaults>
</compile_context>

<pallas_src>
import math

import jax
import jax.numpy as jnp
from jax.experimental import pallas as pl
from jax.experimental.pallas import tpu as pltpu


def _vmem_capacity_bytes():
    """Trace-time VMEM capacity; conservative v7x fallback if the query fails."""
    try:
        return int(pltpu.get_tpu_info().vmem_capacity_bytes)
    except Exception:
        return 64 * 1024 * 1024


def _rel_bias_kernel(a_ref, pj_ref, out_ref):
    """out[b, t, j*D + d] = a[b, t, d] - p[b, j, d], emitted in 128-lane-aligned chunks.

    a_ref  : (B, TI, P)    i-term (emb@W^T + bias), lane-replicated to period P = lcm(D, 128)
    pj_ref : (B, 1, TJD)   j-term (emb@W^T), lane-dense over (j, d) for this j tile
    out_ref: (B, TI, TJD)  lane-dense output tile
    """
    p_lanes = a_ref.shape[-1]          # P: multiple of 128 and of D
    tjd = out_ref.shape[-1]
    n_full = tjd // p_lanes
    tail = tjd - n_full * p_lanes      # multiple of D, < P (only when TJD is a short full row)

    def emit_full(start):
        # Whole-vreg reuse of the i-term: no cross-lane XLU work, one VPU subtract per
        # output element, unmasked vector stores (chunk width is a multiple of 128).
        out_ref[:, :, pl.ds(start, p_lanes)] = (
            a_ref[...] - pj_ref[:, :, pl.ds(start, p_lanes)]
        ).astype(out_ref.dtype)

    if 0 < n_full <= 16:
        for c in range(n_full):        # static unroll, compile-time chunk starts
            emit_full(c * p_lanes)
    elif n_full > 16:
        @pl.loop(0, n_full)
        def _(c):
            emit_full(pl.multiple_of(c * p_lanes, 128))

    if tail > 0:                        # ragged lane tail (masked store), small problems only
        start = n_full * p_lanes
        out_ref[:, :, pl.ds(start, tail)] = (
            a_ref[:, :, :tail] - pj_ref[:, :, pl.ds(start, tail)]
        ).astype(out_ref.dtype)


def _choose_tiles(batch, seq, lane_total, period, out_itemsize, vmem_cap):
    """Pick (TI rows, TJD lanes) per grid step.

    Budget covers the double-buffered output block plus the pj and a128 input blocks.
    TI is a multiple of the sublane quantum (or = S); TJD is a multiple of P (itself a
    multiple of 128) or the full S*D row.
    """
    budget = max(int(vmem_cap * 0.45), 2 * 1024 * 1024)
    sub = 16 if out_itemsize < 4 else 8          # bf16 packs (16,128); f32 packs (8,128)

    def tile_bytes(ti, tjd):
        return (2 * batch * ti * tjd * out_itemsize   # output block, double buffered
                + 2 * batch * tjd * 4                 # pj block (f32)
                + 2 * batch * ti * period * 4)        # a128 block (f32)

    ti_min = min(seq, sub)
    if tile_bytes(ti_min, lane_total) <= budget:
        # Full output rows per step -> fully contiguous HBM writeback; maximize TI.
        tjd = lane_total
        per_ti = 2 * batch * lane_total * out_itemsize + 2 * batch * period * 4
        fixed = 2 * batch * lane_total * 4
        ti_cap = max(ti_min, (budget - fixed) // max(per_ti, 1))
        ti = seq if ti_cap >= seq else max(sub, (ti_cap // sub) * sub)
    else:
        # Very large S*D: tile the lane (j) axis too, keep TI minimal.
        ti = ti_min
        per_lane = 2 * batch * ti * out_itemsize + 2 * batch * 4
        fixed = 2 * batch * ti * period * 4
        tjd_cap = (budget - fixed) // max(per_lane, 1)
        tjd = max(period, (tjd_cap // period) * period)
        tjd = min(tjd, lane_total)

    # Give the (parallel) grid at least 2 steps when possible so v7x's 2 TensorCores
    # both get work; ~0.35 us overhead on 1-TC chips, negligible vs. the tile writeback.
    if pl.cdiv(seq, ti) * pl.cdiv(lane_total, tjd) == 1 and seq >= 2 * sub:
        ti = max(sub, ((seq // 2) // sub) * sub)
    return ti, tjd


def relative_attention_bias(positions, weight, bias, *, force_kernel=False):
    """positions: (B, L, 5); weight: (D, 5); bias: (D,) -> (B, L+1, L+1, D)."""
    B, L, F = positions.shape
    D, Fw = weight.shape
    assert Fw == F, f"weight feature dim {Fw} != positions feature dim {F}"
    S = L + 1
    SD = S * D

    out_dtype = weight.dtype if jnp.issubdtype(weight.dtype, jnp.floating) else jnp.float32
    out_itemsize = jnp.dtype(out_dtype).itemsize

    # O(B*S*D) projection glue (f32, exact): zero-row pad, project each row once,
    # fold the Linear bias into the i-term.
    emb = jnp.pad(positions.astype(jnp.float32), ((0, 0), (1, 0), (0, 0)))     # (B, S, F)
    p = jnp.einsum("bsf,df->bsd", emb, weight.astype(jnp.float32),
                   precision="highest")                                         # (B, S, D)
    a = p + bias.astype(jnp.float32)                                            # (B, S, D)

    # Tiny-problem fast path: XLA fusion beats pallas_call launch/grid overhead.
    if (B * S * SD * out_itemsize) < (1 << 20) and not force_kernel:
        return (a[:, :, None, :] - p[:, None, :, :]).astype(out_dtype)

    # Lane-period replication of the i-term: period P = lcm(D, 128), so every in-kernel
    # reuse is a whole number of vregs (no cross-lane shuffles, no output-sized temp).
    P = D * (128 // math.gcd(D, 128))
    a128 = jnp.tile(a, (1, 1, P // D))                                          # (B, S, P)
    pj = p.reshape(B, 1, SD)                                                    # (B, 1, S*D)

    vmem_cap = _vmem_capacity_bytes()
    TI, TJD = _choose_tiles(B, S, SD, P, out_itemsize, vmem_cap)
    grid = (pl.cdiv(S, TI), pl.cdiv(SD, TJD))   # j (lane) axis innermost -> streaming writeback

    out2d = pl.pallas_call(
        _rel_bias_kernel,
        out_shape=jax.ShapeDtypeStruct((B, S, SD), out_dtype),
        grid_spec=pltpu.PrefetchScalarGridSpec(
            num_scalar_prefetch=0,
            grid=grid,
            in_specs=[
                pl.BlockSpec((B, TI, P), lambda i, j: (0, i, 0)),     # a128: i-tile rows
                pl.BlockSpec((B, 1, TJD), lambda i, j: (0, 0, j)),    # pj: j-tile lanes
            ],
            out_specs=pl.BlockSpec((B, TI, TJD), lambda i, j: (0, i, j)),
        ),
        compiler_params=pltpu.CompilerParams(
            dimension_semantics=("parallel", "parallel"),   # all tiles independent
            vmem_limit_bytes=int(vmem_cap * 0.85),
        ),
    )(a128, pj)

    # Contiguous (free) reshape back to the PyTorch output layout.
    return out2d.reshape(B, S, S, D)


def _reference(positions, weight, bias):
    emb = jnp.pad(positions.astype(jnp.float32), ((0, 0), (1, 0), (0, 0)))
    diff = emb[:, :, None, :] - emb[:, None, :, :]
    return jnp.einsum("bijf,df->bijd", diff, weight.astype(jnp.float32),
                      precision="highest") + bias.astype(jnp.float32)


if __name__ == "__main__":
    key = jax.random.PRNGKey(0)
    k_pos, k_w, k_b = jax.random.split(key, 3)

    B, L, F, D = 2, 7, 5, 32          # seq S = L + 1 = 8, dim = 32
    positions = jax.random.normal(k_pos, (B, L, F), dtype=jnp.float32)

    # deterministic synthetic Linear(5, D) parameters (PyTorch-style uniform range)
    bound = 1.0 / (F ** 0.5)
    weight = jax.random.uniform(k_w, (D, F), jnp.float32, -bound, bound)
    bias = jax.random.uniform(k_b, (D,), jnp.float32, -bound, bound)

    # force_kernel=True so the Pallas path (not the tiny-shape XLA fast path) is exercised.
    out = relative_attention_bias(positions, weight, bias, force_kernel=True)
    out = jax.block_until_ready(out)

    ref = _reference(positions, weight, bias)
    assert out.shape == (B, L + 1, L + 1, D)
    assert out.dtype == weight.dtype
    assert jnp.allclose(out, ref, atol=1e-4, rtol=1e-4), "mismatch vs reference"

    print("KERNEL_OK")
</pallas_src>

<mosaic_0001>
module attributes {stable_mosaic.version = 11 : i64} {
  func.func @_rel_bias_kernel(%arg0: i32, %arg1: i32, %arg2: memref<2x8x128xf32, #tpu.memory_space<vmem>>, %arg3: memref<2x1x256xf32, #tpu.memory_space<vmem>>, %arg4: memref<2x8x256xf32, #tpu.memory_space<vmem>>) attributes {dimension_semantics = [#tpu.dimension_semantics<parallel>, #tpu.dimension_semantics<parallel>], iteration_bounds = array<i64: 1, 1>, scalar_prefetch = 0 : i64, scratch_operands = 0 : i64, tpu.core_type = #tpu.core_type<tc>, window_params = [{transform_indices = @transform_0, window_bounds = array<i64: 2, 8, 128>}, {transform_indices = @transform_1, window_bounds = array<i64: 2, 1, 256>}, {transform_indices = @transform_2, window_bounds = array<i64: 2, 8, 256>}]} {
    %c0 = arith.constant 0 : index
    %c0_0 = arith.constant 0 : index
    %c0_1 = arith.constant 0 : index
    %0 = vector.load %arg2[%c0, %c0_0, %c0_1] : memref<2x8x128xf32, #tpu.memory_space<vmem>>, vector<2x8x128xf32>
    %c0_2 = arith.constant 0 : index
    %c0_3 = arith.constant 0 : index
    %c0_4 = arith.constant 0 : index
    %1 = vector.load %arg3[%c0_2, %c0_3, %c0_4] : memref<2x1x256xf32, #tpu.memory_space<vmem>>, vector<2x1x128xf32>
    %2 = vector.broadcast %1 : vector<2x1x128xf32> to vector<2x8x128xf32>
    %3 = arith.subf %0, %2 : vector<2x8x128xf32>
    %c0_5 = arith.constant 0 : index
    %c0_6 = arith.constant 0 : index
    %c0_7 = arith.constant 0 : index
    %4 = vector.load %arg4[%c0_5, %c0_6, %c0_7] : memref<2x8x256xf32, #tpu.memory_space<vmem>>, vector<2x8x128xf32>
    tpu.vector_store %arg4[%c0_5, %c0_6, %c0_7], %3 {strides = array<i32>} : memref<2x8x256xf32, #tpu.memory_space<vmem>>, vector<2x8x128xf32>,
    %c0_8 = arith.constant 0 : index
    %c0_9 = arith.constant 0 : index
    %c0_10 = arith.constant 0 : index
    %5 = vector.load %arg2[%c0_8, %c0_9, %c0_10] : memref<2x8x128xf32, #tpu.memory_space<vmem>>, vector<2x8x128xf32>
    %c0_11 = arith.constant 0 : index
    %c0_12 = arith.constant 0 : index
    %c128 = arith.constant 128 : index
    %6 = vector.load %arg3[%c0_11, %c0_12, %c128] : memref<2x1x256xf32, #tpu.memory_space<vmem>>, vector<2x1x128xf32>
    %7 = vector.broadcast %6 : vector<2x1x128xf32> to vector<2x8x128xf32>
    %8 = arith.subf %5, %7 : vector<2x8x128xf32>
    %c0_13 = arith.constant 0 : index
    %c0_14 = arith.constant 0 : index
    %c128_15 = arith.constant 128 : index
    %9 = vector.load %arg4[%c0_13, %c0_14, %c128_15] : memref<2x8x256xf32, #tpu.memory_space<vmem>>, vector<2x8x128xf32>
    tpu.vector_store %arg4[%c0_13, %c0_14, %c128_15], %8 {strides = array<i32>} : memref<2x8x256xf32, #tpu.memory_space<vmem>>, vector<2x8x128xf32>,
    return
  }
  func.func @transform_0(%arg0: i32, %arg1: i32) -> (i32, i32, i32) {
    %c0_i32 = arith.constant 0 : i32
    %c0_i32_0 = arith.constant 0 : i32
    %c0_i32_1 = arith.constant 0 : i32
    return %c0_i32, %arg0, %c0_i32_0 : i32, i32, i32
  }
  func.func @transform_1(%arg0: i32, %arg1: i32) -> (i32, i32, i32) {
    %c0_i32 = arith.constant 0 : i32
    %c0_i32_0 = arith.constant 0 : i32
    %c0_i32_1 = arith.constant 0 : i32
    return %c0_i32, %c0_i32_0, %arg1 : i32, i32, i32
  }
  func.func @transform_2(%arg0: i32, %arg1: i32) -> (i32, i32, i32) {
    %c0_i32 = arith.constant 0 : i32
    %c0_i32_0 = arith.constant 0 : i32
    return %c0_i32, %arg0, %arg1 : i32, i32, i32
  }
}

</mosaic_0001>

<llo_original>
// kernel: tpu_custom_call.1
$region0: #{tpu_custom_call.1}
  #allocation0 [shape = 'u32[]', space=smem, size = 0x4, offset = 0x4, fixed_abs, tag = 'smem constant byte address 0x4 - core index']
  #allocation1 [shape = 'u32[144,128]{1,0:T(1,128)}', space=vmem, size = 0x12000, scoped, tag = 'internal scratch']
  %s0 = inlined_call_operand.hbm [shape: f32[2,8,128], index: 0, kind: input, shape index: {}]
  %s1 = inlined_call_operand.hbm [shape: f32[2,1,256], index: 1, kind: input, shape index: {}]
  %s2 = inlined_call_operand.hbm [shape: f32[2,8,256], index: 2, kind: output, shape index: {}]
  %s3 = sld [smem:[#allocation0]]
  $region26: #{tpu_custom_call.1} parent=0
    _
  %s5 = ssub.s32 1, %s3
  %s6 = scalar_select 0, %s5, %s3
  $region1: #{tpu_custom_call.1} parent=0
    #allocation2 [shape = 'u8[8192]{0}', space=vmem, size = 0x2000, scoped, tag = 'input window, operand 0, single buffered']
    #allocation3 [shape = 's32[1]{0}', space=sflag, size = 0x4, scoped, tag = 'scoped memory for tpu_custom_call.1']
    #allocation4 [shape = 's32[1]{0}', space=sflag, size = 0x4, scoped, tag = 'scoped memory for tpu_custom_call.1']
    #allocation5 [shape = 'u8[2048]{0}', space=vmem, size = 0x800, scoped, tag = 'input window, operand 1, single buffered']
    #allocation6 [shape = 's32[1]{0}', space=sflag, size = 0x4, scoped, tag = 'scoped memory for tpu_custom_call.1']
    #allocation7 [shape = 'u8[16384]{0}', space=vmem, size = 0x4000, scoped, tag = 'output window, operand 0, single buffered']
    %7 = vsyncpa [#allocation3], 0
    %8 = vsyncpa [#allocation6], 0
    %9 = vsyncpa [#allocation4], 0
    // Predicated region
    $region2: #{tpu_custom_call.1} parent=1 // pred_check
      _
    $region3: #{tpu_custom_call.1} parent=1 // pred_check_branch
      %11 = sbr.rel (0) target = $region5
    $region4: #{tpu_custom_call.1} parent=1 // pred_region
      %s13 = ssub.s32 256, 256
      %14 = vsyncadd [#allocation3], %s13
      %s15 = sshll.u32 [#allocation2], 4
      %s16 = int_to_ptr.vmem [resolvable:$true] %s15
      %21 = dma.hbm_to_vmem [thread:$0]  %s0, 256, %s16, [#allocation3], 128, 128, 8
    $region5: #{tpu_custom_call.1} parent=1 // pred_fallthru
      _
    // Predicated region
    $region6: #{tpu_custom_call.1} parent=1 // pred_check
      _
    $region7: #{tpu_custom_call.1} parent=1 // pred_check_branch
      %23 = sbr.rel (0) target = $region9
    $region8: #{tpu_custom_call.1} parent=1 // pred_region
      %s25 = ssub.s32 64, 64
      %26 = vsyncadd [#allocation6], %s25
      %s27 = sshll.u32 [#allocation5], 4
      %s28 = int_to_ptr.vmem [resolvable:$true] %s27
      %33 = dma.hbm_to_vmem [thread:$0]  %s1, 64, %s28, [#allocation6], 32, 32, 2
    $region9: #{tpu_custom_call.1} parent=1 // pred_fallthru
      _
    // Predicated region
    $region10: #{tpu_custom_call.1} parent=1 // pred_check
      _
    $region11: #{tpu_custom_call.1} parent=1 // pred_check_branch
      %35 = sbr.rel (0) target = $region13
    $region12: #{tpu_custom_call.1} parent=1 // pred_region
      %36 = dma.done [#allocation3], 256
    $region13: #{tpu_custom_call.1} parent=1 // pred_fallthru
      _
    // Predicated region
    $region14: #{tpu_custom_call.1} parent=1 // pred_check
      _
    $region15: #{tpu_custom_call.1} parent=1 // pred_check_branch
      %38 = sbr.rel (0) target = $region17
    $region16: #{tpu_custom_call.1} parent=1 // pred_region
      %39 = dma.done [#allocation6], 64
    $region17: #{tpu_custom_call.1} parent=1 // pred_fallthru
      _
    %v40 = vld [vmem:[#allocation2] sm:$0xff]
    %v41 = vld [vmem:[#allocation2 + $0x8] sm:$0xff]
    %v42 = vld [vmem:[#allocation5] sm:$0x1]
    %v43 = vld [vmem:[#allocation5 + $0x2] sm:$0x1]
    %v46 = vlaneseq
    %v47 = vshrl.u32 %v46, 7
    %v48 = vsub.s32 0, %v47
    %v49 = vrot.slane %v42, %v48
    %v50 = vlaneseq
    %v51 = vshrl.u32 %v50, 7
    %v52 = vsub.s32 0, %v51
    %v53 = vrot.slane %v43, %v52
    %v56 = vsub.f32 %v40, %v49
    %v57 = vsub.f32 %v41, %v53
    %58 = vst [vmem:[#allocation7] sm:$0xff] %v56
    %59 = vst [vmem:[#allocation7 + $0x10] sm:$0xff] %v57
    %v60 = vld [vmem:[#allocation2] sm:$0xff]
    %v61 = vld [vmem:[#allocation2 + $0x8] sm:$0xff]
    %v62 = vld [vmem:[#allocation5 + $0x1] sm:$0x1]
    %v63 = vld [vmem:[#allocation5 + $0x3] sm:$0x1]
    %v66 = vlaneseq
    %v67 = vshrl.u32 %v66, 7
    %v68 = vsub.s32 0, %v67
    %v69 = vrot.slane %v62, %v68
    %v70 = vlaneseq
    %v71 = vshrl.u32 %v70, 7
    %v72 = vsub.s32 0, %v71
    %v73 = vrot.slane %v63, %v72
    %v76 = vsub.f32 %v60, %v69
    %v77 = vsub.f32 %v61, %v73
    %78 = vst [vmem:[#allocation7 + $0x8] sm:$0xff] %v76
    %79 = vst [vmem:[#allocation7 + $0x18] sm:$0xff] %v77
    // Predicated region
    $region18: #{tpu_custom_call.1} parent=1 // pred_check
      _
    $region19: #{tpu_custom_call.1} parent=1 // pred_check_branch
      %81 = sbr.rel (0) target = $region21
    $region20: #{tpu_custom_call.1} parent=1 // pred_region
      %s83 = ssub.s32 512, 512
      %84 = vsyncadd [#allocation4], %s83
      %s85 = sshll.u32 [#allocation7], 4
      %s86 = int_to_ptr.vmem [resolvable:$true] %s85
      %91 = dma.vmem_to_hbm [thread:$0]  %s86, 512, %s2, [#allocation4], 256, 256, 16
    $region21: #{tpu_custom_call.1} parent=1 // pred_fallthru
      _
    // Predicated region
    $region22: #{tpu_custom_call.1} parent=1 // pred_check
      _
    $region23: #{tpu_custom_call.1} parent=1 // pred_check_branch
      %93 = sbr.rel (0) target = $region25
    $region24: #{tpu_custom_call.1} parent=1 // pred_region
      %94 = dma.done [#allocation4], 512
    $region25: #{tpu_custom_call.1} parent=1 // pred_fallthru
      _
    %95 = vsyncpa [#allocation3], 1
    %96 = vsyncpa [#allocation6], 1
    %97 = vsyncpa [#allocation4], 1

</llo_original>
